<compile_context>
chip_gen: v7x
topology: tpu7x:2x2x1
jax: 0.10.0
libtpu: 0.0.40
codegen_flags: <defaults>
</compile_context>

<pallas_src>
import jax
import jax.numpy as jnp
from jax.experimental import pallas as pl
from jax.experimental.pallas import tpu as pltpu

_LANE = 128
_MAX_BT = 64


def _round_up(v, m):
    return ((v + m - 1) // m) * m


def _vmem_capacity_bytes():
    """Best-effort VMEM capacity query; falls back to 128 MiB (v5e/v6e)."""
    try:
        info = pltpu.get_tpu_info()
    except Exception:
        return 128 << 20
    for attr in ("vmem_capacity_bytes", "vmem_size_bytes", "vmem_bytes"):
        v = getattr(info, attr, None)
        if v:
            return int(v)
    return 128 << 20


def _make_channel_attention_kernel(bt, c, hw_tile, acc_w, hw_true, needs_mask,
                                   b_sub, c_sub):
    n_chunks = hw_tile // acc_w
    inv_hw = 1.0 / float(hw_true)

    def kernel(x_ref, w1t_hbm, w2t_hbm, o_ref,
               max_acc, sum_acc, w1_vmem, w2_vmem, w_sem):
        hw = pl.program_id(1)
        last = pl.num_programs(1) - 1

        def w_copies():
            return (pltpu.make_async_copy(w1t_hbm, w1_vmem, w_sem.at[0]),
                    pltpu.make_async_copy(w2t_hbm, w2_vmem, w_sem.at[1]))

        # ---- first spatial tile: init accumulators, prefetch SE weights ----
        @pl.when(hw == 0)
        def _init():
            for cp in w_copies():          # single-buffered weight prefetch
                cp.start()
            max_acc[...] = jnp.full_like(max_acc, -jnp.inf)
            sum_acc[...] = jnp.zeros_like(sum_acc)

        # ---- fold one (bt, C, hw_tile) block into the running max/sum ----
        # Sub-blocked over (batch, C) so the live working set (m, s, chunk)
        # stays well inside the 64-vreg file.
        def fold(masked):
            base = hw * hw_tile
            for b0 in range(0, bt, b_sub):
                b1 = min(b0 + b_sub, bt)
                for c0 in range(0, c, c_sub):
                    c1 = min(c0 + c_sub, c)
                    m0 = max_acc[b0:b1, c0:c1, :]
                    s0 = sum_acc[b0:b1, c0:c1, :]
                    if masked:
                        # Hoisted: one lane-iota per sub-block, reused for every
                        # chunk and for both the max- and sum-selects.
                        lane = jax.lax.broadcasted_iota(
                            jnp.int32, (b1 - b0, c1 - c0, acc_w), 2)

                    def step(k, m, s):
                        if n_chunks == 1:
                            chunk = x_ref[b0:b1, c0:c1, :].astype(jnp.float32)
                        else:
                            start = pl.multiple_of(k * acc_w, acc_w)
                            chunk = x_ref[b0:b1, c0:c1,
                                          pl.ds(start, acc_w)].astype(jnp.float32)
                        if masked:
                            # Positions >= H*W (incl. the Pallas-padded tail of a
                            # partial last block) are discarded by the selects,
                            # so garbage there cannot propagate.
                            valid = lane < (hw_true - base - k * acc_w)
                            m = jnp.maximum(m, jnp.where(valid, chunk, -jnp.inf))
                            s = s + jnp.where(valid, chunk, 0.0)
                        else:
                            m = jnp.maximum(m, chunk)
                            s = s + chunk
                        return m, s

                    if n_chunks == 1:
                        m0, s0 = step(0, m0, s0)
                    else:
                        m0, s0 = jax.lax.fori_loop(
                            0, n_chunks,
                            lambda k, ms: step(k, ms[0], ms[1]),
                            (m0, s0), unroll=2)

                    max_acc[b0:b1, c0:c1, :] = m0
                    sum_acc[b0:b1, c0:c1, :] = s0

        if needs_mask:
            # Mask cost is paid only on the (single) partial last tile.
            @pl.when(hw < last)
            def _full_tiles():
                fold(masked=False)

            @pl.when(hw == last)
            def _tail_tile():
                fold(masked=True)
        else:
            fold(masked=False)

        # ---- epilogue: cross-lane reduce + SE tail + sigmoid ----
        @pl.when(hw == last)
        def _finalize():
            max_v = jnp.max(max_acc[...], axis=-1)               # (bt, c)
            mean_v = jnp.sum(sum_acc[...], axis=-1) * inv_hw     # (bt, c)
            for cp in w_copies():                                # weights ready
                cp.wait()
            w1t = w1_vmem[...]                                   # (c, cr)
            h = (jnp.maximum(jnp.dot(max_v, w1t,
                                     preferred_element_type=jnp.float32), 0.0)
                 + jnp.maximum(jnp.dot(mean_v, w1t,
                                       preferred_element_type=jnp.float32), 0.0))
            y = jnp.dot(h, w2_vmem[...],
                        preferred_element_type=jnp.float32)      # (bt, c)
            o_ref[...] = jax.nn.sigmoid(y)[:, None, :].astype(o_ref.dtype)

    return kernel


def channel_attention(x, w1, w2):
    """ChannelAttention forward.

    x : (B, C, H, W);  w1 : (C//r, C);  w2 : (C, C//r)  (squeezed 1x1 conv weights)
    Returns the attention map (B, C, 1, 1), matching the PyTorch module.
    """
    B, C, H, W = x.shape
    Cr = w1.shape[0]
    HW = H * W
    itemsize = jnp.dtype(x.dtype).itemsize
    w_itemsize = jnp.dtype(w1.dtype).itemsize

    # ---- generation-aware budgets ----
    vmem_cap = _vmem_capacity_bytes()
    if vmem_cap <= (64 << 20):
        # v7x: 64 MiB VMEM per TensorCore -> conservative block budget.
        x_budget, max_hw_tile, soft_cap = 6 << 20, 4096, 40 << 20
    else:
        # v5e / v6e: 128 MiB VMEM -> larger blocks amortize per-step overhead.
        x_budget, max_hw_tile, soft_cap = 12 << 20, 8192, 56 << 20

    # ---- spatial (reduction) tile: lane-aligned, never exceeds H*W ----
    if HW <= _LANE:
        hw_tile = HW                              # full dim -> no 128 constraint
    else:
        budget_cap = max(_LANE, (x_budget // (C * itemsize)) // _LANE * _LANE)
        hw_cap = max(_LANE, min(max_hw_tile, (HW // _LANE) * _LANE, budget_cap))
        n_steps = pl.cdiv(HW, hw_cap)
        # Balance the tiles so the masked last tile is not mostly padding.
        hw_tile = min(hw_cap, _round_up(pl.cdiv(HW, n_steps), _LANE))
    n_hw = pl.cdiv(HW, hw_tile)
    needs_mask = (n_hw * hw_tile) != HW
    acc_w = min(_LANE, hw_tile)

    # ---- batch tile: >=2 blocks on the parallel axis (v7x), bounded by VMEM ----
    bt_cap_par = pl.cdiv(B, 2) if B >= 2 else 1
    bt_by_x = max(1, x_budget // max(1, C * hw_tile * itemsize))
    bt_by_acc = max(1, (x_budget // 2) // max(1, 2 * C * acc_w * 4))
    bt = int(max(1, min(B, bt_cap_par, _MAX_BT, bt_by_x, bt_by_acc)))
    n_b = pl.cdiv(B, bt)

    # ---- fold sub-blocking: keep m/s/chunk within ~48 live vregs ----
    c_sub = C if C <= 64 else 64
    vregs_per_row = -(-c_sub // 8)
    b_sub = max(1, min(bt, 16 // vregs_per_row))

    x_flat = x.reshape(B, C, HW)
    w1t = jnp.transpose(w1)        # (C, Cr)
    w2t = jnp.transpose(w2)        # (Cr, C)

    kernel = _make_channel_attention_kernel(
        bt, C, hw_tile, acc_w, HW, needs_mask, b_sub, c_sub)

    # ---- scoped-VMEM limit with headroom (x block is double-buffered) ----
    x_block_bytes = bt * C * hw_tile * itemsize
    acc_bytes = 2 * bt * C * max(acc_w, _LANE) * 4
    w_bytes = 2 * C * Cr * w_itemsize                 # single-buffered scratch
    out_bytes = 2 * bt * max(C, _LANE) * itemsize
    need = 2 * x_block_bytes + acc_bytes + w_bytes + out_bytes
    vmem_limit = int(min(max(int(need * 1.3) + (2 << 20), 8 << 20), soft_cap))
    vmem_limit = int(max(vmem_limit, need + (1 << 20)))

    out = pl.pallas_call(
        kernel,
        out_shape=jax.ShapeDtypeStruct((B, 1, C), x.dtype),
        grid_spec=pltpu.PrefetchScalarGridSpec(
            num_scalar_prefetch=0,
            grid=(n_b, n_hw),                          # reduction axis last
            in_specs=[
                pl.BlockSpec((bt, C, hw_tile), lambda b, h: (b, 0, h)),
                pl.BlockSpec(memory_space=pl.ANY),     # w1t: DMA'd once / block
                pl.BlockSpec(memory_space=pl.ANY),     # w2t: DMA'd once / block
            ],
            out_specs=pl.BlockSpec((bt, 1, C), lambda b, h: (b, 0, 0)),
            scratch_shapes=[
                pltpu.VMEM((bt, C, acc_w), jnp.float32),   # running max
                pltpu.VMEM((bt, C, acc_w), jnp.float32),   # running sum
                pltpu.VMEM((C, Cr), w1.dtype),             # w1t (single buffer)
                pltpu.VMEM((Cr, C), w2.dtype),             # w2t (single buffer)
                pltpu.SemaphoreType.DMA((2,)),
            ],
        ),
        compiler_params=pltpu.CompilerParams(
            dimension_semantics=("parallel", "arbitrary"),
            vmem_limit_bytes=vmem_limit,
        ),
    )(x_flat, w1t, w2t)

    return out.reshape(B, C, 1, 1)


def channel_attention_ref(x, w1, w2):
    """Pure-JAX reference mirroring the PyTorch forward."""
    max_v = jnp.max(x, axis=(2, 3))                       # (B, C)
    avg_v = jnp.mean(x, axis=(2, 3))                      # (B, C)

    def se(v):
        h = jnp.maximum(v @ w1.T, 0.0)                    # (B, Cr)
        return h @ w2.T                                   # (B, C)

    out = jax.nn.sigmoid(se(max_v) + se(avg_v))           # (B, C)
    return out[:, :, None, None]


def _make_inputs(key, B, C, H, W, reduction):
    Cr = max(1, C // reduction)
    kx, k1, k2 = jax.random.split(key, 3)
    x = jax.random.normal(kx, (B, C, H, W), dtype=jnp.float32)
    # Shapes from nn.Conv2d(C, C//r, 1, bias=False) / nn.Conv2d(C//r, C, 1, bias=False),
    # with the trailing 1x1 squeezed.
    w1 = jax.random.normal(k1, (Cr, C), dtype=jnp.float32) * 0.3
    w2 = jax.random.normal(k2, (C, Cr), dtype=jnp.float32) * 0.3
    return x, w1, w2


if __name__ == "__main__":
    key = jax.random.PRNGKey(0)
    k_a, k_b, k_c = jax.random.split(key, 3)

    # Test 1: small module-consistent shape (channel=6, reduction=3, 16x16 spatial).
    x, w1, w2 = _make_inputs(k_a, 2, 6, 16, 16, 3)
    out = jax.block_until_ready(channel_attention(x, w1, w2))
    ref = channel_attention_ref(x, w1, w2)
    assert out.shape == (2, 6, 1, 1)
    assert jnp.allclose(out, ref, atol=2e-5, rtol=1e-5), "mismatch vs reference (test 1)"

    # Test 2: multi-tile spatial reduction with a masked partial last tile and a
    # padded last batch block (B=3, bt=2).
    x2, w12, w22 = _make_inputs(k_b, 3, 12, 71, 73, 3)
    out2 = jax.block_until_ready(channel_attention(x2, w12, w22))
    ref2 = channel_attention_ref(x2, w12, w22)
    assert out2.shape == (3, 12, 1, 1)
    assert jnp.allclose(out2, ref2, atol=2e-5, rtol=1e-5), "mismatch vs reference (test 2)"

    # Test 3: small spatial map (7x7, HW < 128) with batch tiling (bt=2, n_b=2).
    x3, w13, w23 = _make_inputs(k_c, 4, 8, 7, 7, 3)
    out3 = jax.block_until_ready(channel_attention(x3, w13, w23))
    ref3 = channel_attention_ref(x3, w13, w23)
    assert out3.shape == (4, 8, 1, 1)
    assert jnp.allclose(out3, ref3, atol=2e-5, rtol=1e-5), "mismatch vs reference (test 3)"

    print("KERNEL_OK")
</pallas_src>

<mosaic_0001>
module attributes {stable_mosaic.version = 11 : i64} {
  func.func @kernel(%arg0: i32, %arg1: i32, %arg2: memref<1x6x256xf32, #tpu.memory_space<vmem>>, %arg3: memref<6x2xf32, #tpu.memory_space<any>>, %arg4: memref<2x6xf32, #tpu.memory_space<any>>, %arg5: memref<1x1x6xf32, #tpu.memory_space<vmem>>, %arg6: memref<1x6x128xf32, #tpu.memory_space<vmem>>, %arg7: memref<1x6x128xf32, #tpu.memory_space<vmem>>, %arg8: memref<6x2xf32, #tpu.memory_space<vmem>>, %arg9: memref<2x6xf32, #tpu.memory_space<vmem>>, %arg10: memref<2x!tpu.dma_semaphore, #tpu.memory_space<semaphore_mem>>) attributes {dimension_semantics = [#tpu.dimension_semantics<parallel>, #tpu.dimension_semantics<arbitrary>], iteration_bounds = array<i64: 2, 1>, scalar_prefetch = 0 : i64, scratch_operands = 5 : i64, tpu.core_type = #tpu.core_type<tc>, window_params = [{transform_indices = @transform_0, window_bounds = array<i64: 1, 6, 256>}, {}, {}, {transform_indices = @transform_3, window_bounds = array<i64: 1, 1, 6>}]} {
    %c0_i32 = arith.constant 0 : i32
    %0 = arith.cmpi eq, %arg1, %c0_i32 : i32
    %1 = arith.extui %0 : i1 to i32
    %c0_i32_0 = arith.constant 0 : i32
    %2 = arith.cmpi ne, %1, %c0_i32_0 : i32
    scf.if %2 {
      %c0_i32_20 = arith.constant 0 : i32
      %22 = tpu.memref_slice %arg10[%c0_i32_20] : memref<2x!tpu.dma_semaphore, #tpu.memory_space<semaphore_mem>> -> memref<1x!tpu.dma_semaphore, #tpu.memory_space<semaphore_mem>>
      %23 = tpu.memref_squeeze %22 : memref<1x!tpu.dma_semaphore, #tpu.memory_space<semaphore_mem>> -> memref<!tpu.dma_semaphore, #tpu.memory_space<semaphore_mem>>
      tpu.enqueue_dma source(%arg3 : memref<6x2xf32, #tpu.memory_space<any>>) target(%arg8 : memref<6x2xf32, #tpu.memory_space<vmem>>) target_semaphore(%23 : memref<!tpu.dma_semaphore, #tpu.memory_space<semaphore_mem>>)
      %c1_i32_21 = arith.constant 1 : i32
      %24 = tpu.memref_slice %arg10[%c1_i32_21] : memref<2x!tpu.dma_semaphore, #tpu.memory_space<semaphore_mem>> -> memref<1x!tpu.dma_semaphore, #tpu.memory_space<semaphore_mem>>
      %25 = tpu.memref_squeeze %24 : memref<1x!tpu.dma_semaphore, #tpu.memory_space<semaphore_mem>> -> memref<!tpu.dma_semaphore, #tpu.memory_space<semaphore_mem>>
      tpu.enqueue_dma source(%arg4 : memref<2x6xf32, #tpu.memory_space<any>>) target(%arg9 : memref<2x6xf32, #tpu.memory_space<vmem>>) target_semaphore(%25 : memref<!tpu.dma_semaphore, #tpu.memory_space<semaphore_mem>>)
      %cst = arith.constant 0xFF800000 : f32
      %26 = vector.broadcast %cst : f32 to vector<1x6x128xf32>
      %c0_22 = arith.constant 0 : index
      %c0_23 = arith.constant 0 : index
      %c0_24 = arith.constant 0 : index
      %27 = vector.load %arg6[%c0_22, %c0_23, %c0_24] : memref<1x6x128xf32, #tpu.memory_space<vmem>>, vector<1x6x128xf32>
      tpu.vector_store %arg6[%c0_22, %c0_23, %c0_24], %26 {strides = array<i32>} : memref<1x6x128xf32, #tpu.memory_space<vmem>>, vector<1x6x128xf32>,
      %cst_25 = arith.constant 0.000000e+00 : f32
      %28 = vector.broadcast %cst_25 : f32 to vector<1x6x128xf32>
      %c0_26 = arith.constant 0 : index
      %c0_27 = arith.constant 0 : index
      %c0_28 = arith.constant 0 : index
      %29 = vector.load %arg7[%c0_26, %c0_27, %c0_28] : memref<1x6x128xf32, #tpu.memory_space<vmem>>, vector<1x6x128xf32>
      tpu.vector_store %arg7[%c0_26, %c0_27, %c0_28], %28 {strides = array<i32>} : memref<1x6x128xf32, #tpu.memory_space<vmem>>, vector<1x6x128xf32>,
    } else {
    }
    %c0 = arith.constant 0 : index
    %c0_1 = arith.constant 0 : index
    %c0_2 = arith.constant 0 : index
    %3 = vector.load %arg6[%c0, %c0_1, %c0_2] : memref<1x6x128xf32, #tpu.memory_space<vmem>>, vector<1x6x128xf32>
    %c0_3 = arith.constant 0 : index
    %c0_4 = arith.constant 0 : index
    %c0_5 = arith.constant 0 : index
    %4 = vector.load %arg7[%c0_3, %c0_4, %c0_5] : memref<1x6x128xf32, #tpu.memory_space<vmem>>, vector<1x6x128xf32>
    %c0_i32_6 = arith.constant 0 : i32
    %c128_i32 = arith.constant 128 : i32
    %5 = arith.muli %c0_i32_6, %c128_i32 : i32
    %6 = tpu.assume_multiple %5, 128 : i32
    %c0_7 = arith.constant 0 : index
    %c0_8 = arith.constant 0 : index
    %7 = arith.index_cast %6 : i32 to index
    %8 = vector.load %arg2[%c0_7, %c0_8, %7] : memref<1x6x256xf32, #tpu.memory_space<vmem>>, vector<1x6x128xf32>
    %9 = arith.maximumf %3, %8 : vector<1x6x128xf32>
    %10 = arith.addf %4, %8 : vector<1x6x128xf32>
    %c1_i32 = arith.constant 1 : i32
    %c128_i32_9 = arith.constant 128 : i32
    %11 = arith.muli %c1_i32, %c128_i32_9 : i32
    %12 = tpu.assume_multiple %11, 128 : i32
    %c0_10 = arith.constant 0 : index
    %c0_11 = arith.constant 0 : index
    %13 = arith.index_cast %12 : i32 to index
    %14 = vector.load %arg2[%c0_10, %c0_11, %13] : memref<1x6x256xf32, #tpu.memory_space<vmem>>, vector<1x6x128xf32>
    %15 = arith.maximumf %9, %14 : vector<1x6x128xf32>
    %16 = arith.addf %10, %14 : vector<1x6x128xf32>
    %c2_i32 = arith.constant 2 : i32
    %c0_12 = arith.constant 0 : index
    %c0_13 = arith.constant 0 : index
    %c0_14 = arith.constant 0 : index
    %17 = vector.load %arg6[%c0_12, %c0_13, %c0_14] : memref<1x6x128xf32, #tpu.memory_space<vmem>>, vector<1x6x128xf32>
    tpu.vector_store %arg6[%c0_12, %c0_13, %c0_14], %15 {strides = array<i32>} : memref<1x6x128xf32, #tpu.memory_space<vmem>>, vector<1x6x128xf32>,
    %c0_15 = arith.constant 0 : index
    %c0_16 = arith.constant 0 : index
    %c0_17 = arith.constant 0 : index
    %18 = vector.load %arg7[%c0_15, %c0_16, %c0_17] : memref<1x6x128xf32, #tpu.memory_space<vmem>>, vector<1x6x128xf32>
    tpu.vector_store %arg7[%c0_15, %c0_16, %c0_17], %16 {strides = array<i32>} : memref<1x6x128xf32, #tpu.memory_space<vmem>>, vector<1x6x128xf32>,
    %c0_i32_18 = arith.constant 0 : i32
    %19 = arith.cmpi eq, %arg1, %c0_i32_18 : i32
    %20 = arith.extui %19 : i1 to i32
    %c0_i32_19 = arith.constant 0 : i32
    %21 = arith.cmpi ne, %20, %c0_i32_19 : i32
    scf.if %21 {
      %c0_20 = arith.constant 0 : index
      %c0_21 = arith.constant 0 : index
      %c0_22 = arith.constant 0 : index
      %22 = vector.load %arg6[%c0_20, %c0_21, %c0_22] : memref<1x6x128xf32, #tpu.memory_space<vmem>>, vector<1x6x128xf32>
      %cst = arith.constant dense<0xFF800000> : vector<1x6xf32>
      %23 = vector.multi_reduction <maximumf>, %22, %cst [2] : vector<1x6x128xf32> to vector<1x6xf32>
      %c0_23 = arith.constant 0 : index
      %c0_24 = arith.constant 0 : index
      %c0_25 = arith.constant 0 : index
      %24 = vector.load %arg7[%c0_23, %c0_24, %c0_25] : memref<1x6x128xf32, #tpu.memory_space<vmem>>, vector<1x6x128xf32>
      %cst_26 = arith.constant dense<0.000000e+00> : vector<1x6xf32>
      %25 = vector.multi_reduction <add>, %24, %cst_26 [2] : vector<1x6x128xf32> to vector<1x6xf32>
      %cst_27 = arith.constant 3.906250e-03 : f32
      %26 = vector.broadcast %cst_27 : f32 to vector<1x6xf32>
      %27 = arith.mulf %25, %26 : vector<1x6xf32>
      %c0_i32_28 = arith.constant 0 : i32
      %28 = tpu.memref_slice %arg10[%c0_i32_28] : memref<2x!tpu.dma_semaphore, #tpu.memory_space<semaphore_mem>> -> memref<1x!tpu.dma_semaphore, #tpu.memory_space<semaphore_mem>>
      %29 = tpu.memref_squeeze %28 : memref<1x!tpu.dma_semaphore, #tpu.memory_space<semaphore_mem>> -> memref<!tpu.dma_semaphore, #tpu.memory_space<semaphore_mem>>
      tpu.wait_dma2 semaphore(%29 : memref<!tpu.dma_semaphore, #tpu.memory_space<semaphore_mem>>) src(%arg3 : memref<6x2xf32, #tpu.memory_space<any>>) dst(%arg8 : memref<6x2xf32, #tpu.memory_space<vmem>>)
      %c1_i32_29 = arith.constant 1 : i32
      %30 = tpu.memref_slice %arg10[%c1_i32_29] : memref<2x!tpu.dma_semaphore, #tpu.memory_space<semaphore_mem>> -> memref<1x!tpu.dma_semaphore, #tpu.memory_space<semaphore_mem>>
      %31 = tpu.memref_squeeze %30 : memref<1x!tpu.dma_semaphore, #tpu.memory_space<semaphore_mem>> -> memref<!tpu.dma_semaphore, #tpu.memory_space<semaphore_mem>>
      tpu.wait_dma2 semaphore(%31 : memref<!tpu.dma_semaphore, #tpu.memory_space<semaphore_mem>>) src(%arg4 : memref<2x6xf32, #tpu.memory_space<any>>) dst(%arg9 : memref<2x6xf32, #tpu.memory_space<vmem>>)
      %c0_30 = arith.constant 0 : index
      %c0_31 = arith.constant 0 : index
      %32 = vector.load %arg8[%c0_30, %c0_31] : memref<6x2xf32, #tpu.memory_space<vmem>>, vector<6x2xf32>
      %cst_32 = arith.constant dense<0.000000e+00> : vector<1x2xf32>
      %33 = tpu.matmul %23, %32, %cst_32 {dimension_numbers = #tpu.dot_dimension_numbers<[1], [0], [0], [1], [0, 0, 1, 1], [], []>} : vector<1x6xf32>, vector<6x2xf32>, vector<1x2xf32> -> vector<1x2xf32>
      %cst_33 = arith.constant 0.000000e+00 : f32
      %34 = vector.broadcast %cst_33 : f32 to vector<1x2xf32>
      %35 = arith.maximumf %33, %34 : vector<1x2xf32>
      %cst_34 = arith.constant dense<0.000000e+00> : vector<1x2xf32>
      %36 = tpu.matmul %27, %32, %cst_34 {dimension_numbers = #tpu.dot_dimension_numbers<[1], [0], [0], [1], [0, 0, 1, 1], [], []>} : vector<1x6xf32>, vector<6x2xf32>, vector<1x2xf32> -> vector<1x2xf32>
      %cst_35 = arith.constant 0.000000e+00 : f32
      %37 = vector.broadcast %cst_35 : f32 to vector<1x2xf32>
      %38 = arith.maximumf %36, %37 : vector<1x2xf32>
      %39 = arith.addf %35, %38 : vector<1x2xf32>
      %c0_36 = arith.constant 0 : index
      %c0_37 = arith.constant 0 : index
      %40 = vector.load %arg9[%c0_36, %c0_37] : memref<2x6xf32, #tpu.memory_space<vmem>>, vector<2x6xf32>
      %cst_38 = arith.constant dense<0.000000e+00> : vector<1x6xf32>
      %41 = tpu.matmul %39, %40, %cst_38 {dimension_numbers = #tpu.dot_dimension_numbers<[1], [0], [0], [1], [0, 0, 1, 1], [], []>} : vector<1x2xf32>, vector<2x6xf32>, vector<1x6xf32> -> vector<1x6xf32>
      %42 = arith.negf %41 : vector<1x6xf32>
      %43 = math.exp %42 : vector<1x6xf32>
      %cst_39 = arith.constant 1.000000e+00 : f32
      %44 = vector.broadcast %cst_39 : f32 to vector<1x6xf32>
      %45 = arith.addf %44, %43 : vector<1x6xf32>
      %46 = arith.divf %44, %45 : vector<1x6xf32>
      %47 = vector.shape_cast %46 : vector<1x6xf32> to vector<1x1x6xf32>
      %c0_40 = arith.constant 0 : index
      %c0_41 = arith.constant 0 : index
      %c0_42 = arith.constant 0 : index
      %48 = vector.load %arg5[%c0_40, %c0_41, %c0_42] : memref<1x1x6xf32, #tpu.memory_space<vmem>>, vector<1x1x6xf32>
      tpu.vector_store %arg5[%c0_40, %c0_41, %c0_42], %47 {strides = array<i32>} : memref<1x1x6xf32, #tpu.memory_space<vmem>>, vector<1x1x6xf32>,
    } else {
    }
    return
  }
  func.func @transform_0(%arg0: i32, %arg1: i32) -> (i32, i32, i32) {
    %c0_i32 = arith.constant 0 : i32
    %c0_i32_0 = arith.constant 0 : i32
    return %arg0, %c0_i32, %arg1 : i32, i32, i32
  }
  func.func @transform_3(%arg0: i32, %arg1: i32) -> (i32, i32, i32) {
    %c0_i32 = arith.constant 0 : i32
    %c0_i32_0 = arith.constant 0 : i32
    %c0_i32_1 = arith.constant 0 : i32
    return %arg0, %c0_i32, %c0_i32_0 : i32, i32, i32
  }
}

</mosaic_0001>

<llo_original>
// kernel: tpu_custom_call.1
$region0: #{tpu_custom_call.1}
  #allocation0 [shape = 'u32[]', space=smem, size = 0x4, offset = 0x4, fixed_abs, tag = 'smem constant byte address 0x4 - core index']
  #allocation1 [shape = 'u32[144,128]{1,0:T(1,128)}', space=vmem, size = 0x12000, scoped, tag = 'internal scratch']
  #allocation2 [shape = 'f32[1,6,128]{2,1,0:T(8,128)}', space=vmem, size = 0x1000, scoped, tag = 'scratch operand']
  #allocation3 [shape = 'f32[1,6,128]{2,1,0:T(8,128)}', space=vmem, size = 0x1000, scoped, tag = 'scratch operand']
  #allocation4 [shape = 'f32[6,2]{1,0:T(8,128)}', space=vmem, size = 0x1000, scoped, tag = 'scratch operand']
  #allocation5 [shape = 'f32[2,6]{1,0:T(2,128)}', space=vmem, size = 0x400, scoped, tag = 'scratch operand']
  #allocation6 [shape = 's32[2]{0}', space=sflag, size = 0x8, scoped, tag = 'scratch operand']
  #allocation9 [shape = 's32[]', space=sflag, size = 0x4, offset = 0, fixed_abs, tag = 'sflag constant byte address 0x0 - dummy sync flag']
  #allocation10 [shape = 's32[]', space=sflag, size = 0x4, offset = 0, fixed_abs, tag = 'sflag constant byte address 0x0 - dummy sync flag']
  %s0 = inlined_call_operand.vmem [shape: f32[2,6,256], index: 0, kind: input, shape index: {}]
  %s1 = inlined_call_operand.vmem [shape: f32[6,2], index: 1, kind: input, shape index: {}]
  %s2 = inlined_call_operand.vmem [shape: f32[2,6], index: 2, kind: input, shape index: {}]
  %s3 = inlined_call_operand.hbm [shape: f32[2,1,6], index: 3, kind: output, shape index: {}]
  %s4 = sld [smem:[#allocation0]]
  $region105: #{tpu_custom_call.1} parent=0
    _
  %s6 = ssub.s32 1, %s4
  %s7 = scalar_select 0, %s6, %s4
  $region1: #{tpu_custom_call.1} parent=0
    #allocation7 [shape = 'u8[1024]{0}', space=vmem, size = 0x400, scoped, tag = 'output window, operand 0']
    #allocation8 [shape = 's32[2]{0}', space=sflag, size = 0x8, scoped, tag = 'scoped memory for tpu_custom_call.1']
    %8 = vsyncpa [#allocation8], 0
    %s9 = scalar_lea.sflag [#allocation8], 1
    %10 = vsyncpa %s9, 0
    loop: start=0, step=1, limit=4
    $region2: #{tpu_custom_call.1} parent=1 // loop_pre_header
      _
    $region3: #{tpu_custom_call.1} parent=1 // loop_header
      %s12 = sphi 0, %s16
      %p13 = scmp.ge.s32.totalorder %s12, 4
      %s19 = sphi 0, %s31
      %s20 = sphi 0, %s27
      %s21 = sphi 0, %s19
      %s22 = sphi 0, %s20
      %s23 = sphi 0, %s21
      %s24 = sphi 0, %s22
      %s36 = sphi 0, %s38
      %s39 = sphi 0, %s36
      %s40 = sphi 0, %s39
      %s56 = sphi 0, %s40
      %s62 = sphi 0, %s64
      %s65 = sphi 0, %s62
      %s66 = sphi 0, %s65
      %s82 = sphi 0, %s66
    $region4: #{tpu_custom_call.1} parent=1 // loop_header_branch
      %15 = sbr.rel (%p13) target = $region8
    $region5: #{tpu_custom_call.1} parent=1 // loop_body
      %s17 = ssub.s32 %s12, 1
      %s18 = ssub.s32 %s12, 2
      %s25 = sadd.s32 1, %s20
      %p26 = scmp.ge.s32.totalorder %s25, 1
      %s27 = scalar_select %p26, 0, %s25
      %s28 = sadd.s32 1, %s19
      %s29 = scalar_select %p26, %s28, %s19
      %p30 = scmp.ge.s32.totalorder %s29, 2
      %s31 = scalar_select %p30, 0, %s29
      %s32 = ssub.s32 %s19, %s31
      %s33 = ssub.s32 %s20, %s27
      %s34 = sor.u32 %s32, %s33
      %p35 = scmp.eq.s32.totalorder %s34, 0
      %s37 = sadd.s32 %s36, 1
      %s38 = scalar_select %p35, %s36, %s37
      %p41 = pneg %p35
      %p42 = scmp.eq.s32.totalorder %s12, 1
      %p43 = por %p41, %p42
      %p44 = scmp.ne.s32.totalorder %s36, %s39
      %p45 = scmp.eq.s32.totalorder %s12, 0
      %p46 = por %p44, %p45
      %p47 = scmp.ne.s32.totalorder %s36, %s39
      %p48 = scmp.eq.s32.totalorder %s17, 1
      %p49 = por %p47, %p48
      %p50 = scmp.ne.s32.totalorder %s39, %s40
      %p51 = scmp.eq.s32.totalorder %s17, 0
      %p52 = por %p50, %p51
      %p53 = scmp.ne.s32.totalorder %s39, %s40
      %p54 = scmp.eq.s32.totalorder %s18, 1
      %p55 = por %p53, %p54
      %p57 = scmp.ne.s32.totalorder %s40, %s56
      %p58 = scmp.eq.s32.totalorder %s18, 0
      %p59 = por %p57, %p58
      %s60 = ssub.s32 %s19, %s31
      %p61 = scmp.eq.s32.totalorder %s60, 0
      %s63 = sadd.s32 %s62, 1
      %s64 = scalar_select %p61, %s62, %s63
      %p67 = pneg %p61
      %p68 = scmp.eq.s32.totalorder %s12, 1
      %p69 = por %p67, %p68
      %p70 = scmp.ne.s32.totalorder %s62, %s65
      %p71 = scmp.eq.s32.totalorder %s12, 0
      %p72 = por %p70, %p71
      %p73 = scmp.ne.s32.totalorder %s62, %s65
      %p74 = scmp.eq.s32.totalorder %s17, 1
      %p75 = por %p73, %p74
      %p76 = scmp.ne.s32.totalorder %s65, %s66
      %p77 = scmp.eq.s32.totalorder %s17, 0
      %p78 = por %p76, %p77
      %p79 = scmp.ne.s32.totalorder %s65, %s66
      %p80 = scmp.eq.s32.totalorder %s18, 1
      %p81 = por %p79, %p80
      %p83 = scmp.ne.s32.totalorder %s66, %s82
      %p84 = scmp.eq.s32.totalorder %s18, 0
      %p85 = por %p83, %p84
      %p86 = scmp.le.s32.totalorder 1, %s12
      %p87 = scmp.lt.s32.totalorder %s12, 3
      %p88 = pnand %p86, %p87
      %p89 = pneg %p88
      // Predicated region
      $region9: #{tpu_custom_call.1} parent=5 // pred_check
        _
      $region10: #{tpu_custom_call.1} parent=5 // pred_check_branch
        %91 = sbr.rel (%p88) target = $region12
      $region11: #{tpu_custom_call.1} parent=5 // pred_region
        %s92 = ssub.s32 %s12, 1
      $region12: #{tpu_custom_call.1} parent=5 // pred_fallthru
        _
      %p93 = scmp.lt.s32.totalorder %s12, 2
      // Predicated region
      $region13: #{tpu_custom_call.1} parent=5 // pred_check
        %p94 = pneg %p93
      $region14: #{tpu_custom_call.1} parent=5 // pred_check_branch
        %96 = sbr.rel (%p94) target = $region16
      $region15: #{tpu_custom_call.1} parent=5 // pred_region
        // Predicated region
        $region17: #{tpu_custom_call.1} parent=15 // pred_check
          %p97 = pneg %p46
        $region18: #{tpu_custom_call.1} parent=15 // pred_check_branch
          %99 = sbr.rel (%p97) target = $region20
        $region19: #{tpu_custom_call.1} parent=15 // pred_region
          %s100 = smul.u32 2, %s20
          %p101 = scmp.lt.s32.totalorder %s19, 1
          %s102 = scalar_select %p101, %s19, 1
          %p103 = scmp.lt.s32.totalorder %s100, 1
          %s104 = scalar_select %p103, %s100, 1
          %s105 = smul.addr %s102, 2
          %s106 = sadd.s32 %s104, %s105
          %s107 = smul.addr %s106, 8
          %s108 = scalar_lea.vmem %s0, %s107
          %s109 = smul.u32 2, %s20
        $region20: #{tpu_custom_call.1} parent=15 // pred_fallthru
          _
      $region16: #{tpu_custom_call.1} parent=5 // pred_fallthru
        _
      %p110 = scmp.le.s32.totalorder 1, %s12
      %p111 = scmp.lt.s32.totalorder %s12, 3
      %p112 = pnand %p110, %p111
      %p113 = pneg %p112
      // Predicated region
      $region21: #{tpu_custom_call.1} parent=5 // pred_check
        _
      $region22: #{tpu_custom_call.1} parent=5 // pred_check_branch
        %115 = sbr.rel (%p112) target = $region24
      $region23: #{tpu_custom_call.1} parent=5 // pred_region
        %s116 = ssub.s32 %s12, 1
        %s117 = smul.u32 2, %s22
        %p118 = scmp.lt.s32.totalorder %s21, 1
        %s119 = scalar_select %p118, %s21, 1
        %p120 = scmp.lt.s32.totalorder %s117, 1
        %s121 = scalar_select %p120, %s117, 1
        %s122 = smul.addr %s119, 2
        %s123 = sadd.s32 %s121, %s122
        %s124 = smul.addr %s123, 8
        %s125 = scalar_lea.vmem %s0, %s124
        %p126 = pneg %p52
        %p127 = pneg %p49
        %p128 = pneg %p78
        %p129 = pneg %p75
        %s130 = sand.u32 %s65, 1
        %s131 = scalar_lea.sflag [#allocation8], %s130
        %s132 = sand.u32 %s65, 1
        %s133 = scalar_lea.vmem [#allocation7], %s132
        %s134 = smul.u32 2, %s22
        %p135 = scmp.lt.s32.totalorder %s21, 1
        %s136 = scalar_select %p135, %s21, 1
        %p137 = scmp.lt.s32.totalorder %s134, 1
        %s138 = scalar_select %p137, %s134, 1
        %s139 = smul.addr %s136, 2
        %s140 = sadd.s32 %s138, %s139
        %s141 = smul.addr %s140, 8
        %s142 = scalar_lea.vmem %s0, %s141
        %s143 = smul.u32 2, %s22
        %p144 = scmp.eq.s32.totalorder %s22, 0
        // Predicated region
        $region25: #{tpu_custom_call.1} parent=23 // pred_check
          %p145 = pneg %p144
        $region26: #{tpu_custom_call.1} parent=23 // pred_check_branch
          %147 = sbr.rel (%p145) target = $region28
        $region27: #{tpu_custom_call.1} parent=23 // pred_region
          %p149 = scmp.lt.u32.totalorder 6, 8
          %p150 = pneg %p149
          // Predicated region
          $region29: #{tpu_custom_call.1} parent=27 // pred_check
            _
          $region30: #{tpu_custom_call.1} parent=27 // pred_check_branch
            %152 = sbr.rel (%p149) target = $region32
          $region31: #{tpu_custom_call.1} parent=27 // pred_region
            %s167 = sand.u32 6, 7
            %p168 = scmp.eq.s32.totalorder %s167, 0
            %p169 = pneg %p168
            // Predicated region
            $region44: #{tpu_custom_call.1} parent=31 // pred_check
              _
            $region45: #{tpu_custom_call.1} parent=31 // pred_check_branch
              %171 = sbr.rel (%p168) target = $region47
            $region46: #{tpu_custom_call.1} parent=31 // pred_region
              %s172 = sand.u32 6, 7
              %s173 = ssub.s32 6, %s172
              %s174 = scalar_lea.vmem %s1, %s173
              %s175 = ssub.s32 6, %s172
              %s176 = scalar_lea.vmem [#allocation4], %s175
              %s177 = sshllo.u32 0, %s172
              loop: start=0, step=1, limit=1
              $region48: #{tpu_custom_call.1} parent=46 // loop_pre_header
                _
              $region49: #{tpu_custom_call.1} parent=46 // loop_header
                %s179 = sphi 0, %s183
                %p180 = scmp.ge.s32.totalorder %s179, 1
                %s184 = sphi %s174, %s174
                %s185 = sphi %s176, %s176
              $region50: #{tpu_custom_call.1} parent=46 // loop_header_branch
                %182 = sbr.rel (%p180) target = $region54
              $region51: #{tpu_custom_call.1} parent=46 // loop_body
                %v186 = vld [vmem:[%s184] sm:%s177]
                %187 = vst [vmem:[%s185] sm:%s177] %v186
              $region52: #{tpu_custom_call.1} parent=46 // loop_footer
                %s183 = sadd.s32 1, %s179
              $region53: #{tpu_custom_call.1} parent=46 // loop_footer_branch
                %178 = sbr.rel target = $region49
              $region54: #{tpu_custom_call.1} parent=46 // loop_exit
                _
            $region47: #{tpu_custom_call.1} parent=31 // pred_fallthru
              _
          $region32: #{tpu_custom_call.1} parent=27 // pred_fallthru
            _
          // Predicated region
          $region33: #{tpu_custom_call.1} parent=27 // pred_check
            %p153 = pneg %p149
          $region34: #{tpu_custom_call.1} parent=27 // pred_check_branch
            %155 = sbr.rel (%p153) target = $region36
          $region35: #{tpu_custom_call.1} parent=27 // pred_region
            %s156 = sshllo.u32 0, 6
            loop: start=0, step=1, limit=1
            $region37: #{tpu_custom_call.1} parent=35 // loop_pre_header
              _
            $region38: #{tpu_custom_call.1} parent=35 // loop_header
              %s158 = sphi 0, %s162
              %p159 = scmp.ge.s32.totalorder %s158, 1
              %s163 = sphi %s1, %s1
              %s164 = sphi [#allocation4], [#allocation4]
            $region39: #{tpu_custom_call.1} parent=35 // loop_header_branch
              %161 = sbr.rel (%p159) target = $region43
            $region40: #{tpu_custom_call.1} parent=35 // loop_body
              %v165 = vld [vmem:[%s163] sm:%s156]
              %166 = vst [vmem:[%s164] sm:%s156] %v165
            $region41: #{tpu_custom_call.1} parent=35 // loop_footer
              %s162 = sadd.s32 1, %s158
            $region42: #{tpu_custom_call.1} parent=35 // loop_footer_branch
              %157 = sbr.rel target = $region38
            $region43: #{tpu_custom_call.1} parent=35 // loop_exit
              _
          $region36: #{tpu_custom_call.1} parent=27 // pred_fallthru
            _
          // Predicated region
          $region55: #{tpu_custom_call.1} parent=27 // pred_check
            _
          $region56: #{tpu_custom_call.1} parent=27 // pred_check_branch
            %190 = sbr.rel (0) target = $region58
          $region57: #{tpu_custom_call.1} parent=27 // pred_region
            %191 = vsyncadd [#allocation6], 96
          $region58: #{tpu_custom_call.1} parent=27 // pred_fallthru
            _
          %s192 = scalar_lea.sflag [#allocation6], 1
          %p194 = scmp.lt.u32.totalorder 2, 8
          %p195 = pneg %p194
          // Predicated region
          $region59: #{tpu_custom_call.1} parent=27 // pred_check
            _
          $region60: #{tpu_custom_call.1} parent=27 // pred_check_branch
            %197 = sbr.rel (%p194) target = $region62
          $region61: #{tpu_custom_call.1} parent=27 // pred_region
            %s212 = sand.u32 2, 7
            %p213 = scmp.eq.s32.totalorder %s212, 0
            %p214 = pneg %p213
            // Predicated region
            $region74: #{tpu_custom_call.1} parent=61 // pred_check
              _
            $region75: #{tpu_custom_call.1} parent=61 // pred_check_branch
              %216 = sbr.rel (%p213) target = $region77
            $region76: #{tpu_custom_call.1} parent=61 // pred_region
              %s217 = sand.u32 2, 7
              %s218 = ssub.s32 2, %s217
              %s219 = scalar_lea.vmem %s2, %s218
              %s220 = ssub.s32 2, %s217
              %s221 = scalar_lea.vmem [#allocation5], %s220
              %s222 = sshllo.u32 0, %s217
              loop: start=0, step=1, limit=1
              $region78: #{tpu_custom_call.1} parent=76 // loop_pre_header
                _
              $region79: #{tpu_custom_call.1} parent=76 // loop_header
                %s224 = sphi 0, %s228
                %p225 = scmp.ge.s32.totalorder %s224, 1
                %s229 = sphi %s219, %s219
                %s230 = sphi %s221, %s221
              $region80: #{tpu_custom_call.1} parent=76 // loop_header_branch
                %227 = sbr.rel (%p225) target = $region84
              $region81: #{tpu_custom_call.1} parent=76 // loop_body
                %v231 = vld [vmem:[%s229] sm:%s222]
                %232 = vst [vmem:[%s230] sm:%s222] %v231
              $region82: #{tpu_custom_call.1} parent=76 // loop_footer
                %s228 = sadd.s32 1, %s224
              $region83: #{tpu_custom_call.1} parent=76 // loop_footer_branch
                %223 = sbr.rel target = $region79
              $region84: #{tpu_custom_call.1} parent=76 // loop_exit
                _
            $region77: #{tpu_custom_call.1} parent=61 // pred_fallthru
              _
          $region62: #{tpu_custom_call.1} parent=27 // pred_fallthru
            _
          // Predicated region
          $region63: #{tpu_custom_call.1} parent=27 // pred_check
            %p198 = pneg %p194
          $region64: #{tpu_custom_call.1} parent=27 // pred_check_branch
            %200 = sbr.rel (%p198) target = $region66
          $region65: #{tpu_custom_call.1} parent=27 // pred_region
            %s201 = sshllo.u32 0, 2
            loop: start=0, step=1, limit=1
            $region67: #{tpu_custom_call.1} parent=65 // loop_pre_header
              _
            $region68: #{tpu_custom_call.1} parent=65 // loop_header
              %s203 = sphi 0, %s207
              %p204 = scmp.ge.s32.totalorder %s203, 1
              %s208 = sphi %s2, %s2
              %s209 = sphi [#allocation5], [#allocation5]
            $region69: #{tpu_custom_call.1} parent=65 // loop_header_branch
              %206 = sbr.rel (%p204) target = $region73
            $region70: #{tpu_custom_call.1} parent=65 // loop_body
              %v210 = vld [vmem:[%s208] sm:%s201]
              %211 = vst [vmem:[%s209] sm:%s201] %v210
            $region71: #{tpu_custom_call.1} parent=65 // loop_footer
              %s207 = sadd.s32 1, %s203
            $region72: #{tpu_custom_call.1} parent=65 // loop_footer_branch
              %202 = sbr.rel target = $region68
            $region73: #{tpu_custom_call.1} parent=65 // loop_exit
              _
          $region66: #{tpu_custom_call.1} parent=27 // pred_fallthru
            _
          // Predicated region
          $region85: #{tpu_custom_call.1} parent=27 // pred_check
            _
          $region86: #{tpu_custom_call.1} parent=27 // pred_check_branch
            %235 = sbr.rel (0) target = $region88
          $region87: #{tpu_custom_call.1} parent=27 // pred_region
            %236 = vsyncadd %s192, 32
          $region88: #{tpu_custom_call.1} parent=27 // pred_fallthru
            _
          %237 = vst [vmem:[#allocation2] sm:$0x3f] -inf
          %238 = vst [vmem:[#allocation3] sm:$0x3f] 0.0
        $region28: #{tpu_custom_call.1} parent=23 // pred_fallthru
          _
        %v239 = vld [vmem:[#allocation2] sm:$0x3f]
        %v240 = vld [vmem:[#allocation3] sm:$0x3f]
        %v241 = vld [vmem:[%s142] sm:$0x3f]
        %v242 = vmax.f32 %v239, %v241
        %v243 = vadd.f32 %v240, %v241
        %s244 = scalar_lea.vmem %s142, 8
        %v245 = vld [vmem:[%s244] sm:$0x3f]
        %v246 = vmax.f32 %v242, %v245
        %v247 = vadd.f32 %v243, %v245
        %248 = vst [vmem:[#allocation2] sm:$0x3f] %v246
        %249 = vst [vmem:[#allocation3] sm:$0x3f] %v247
        // Predicated region
        $region89: #{tpu_custom_call.1} parent=23 // pred_check
          %p250 = pneg %p144
        $region90: #{tpu_custom_call.1} parent=23 // pred_check_branch
          %252 = sbr.rel (%p250) target = $region92
        $region91: #{tpu_custom_call.1} parent=23 // pred_region
          %v253 = vld [vmem:[#allocation2] sm:$0x3f]
          %vm254 = vcmask 1045504
          %v255 = vsel %vm254, %v253, -inf
          %256 = vmax.xlane.f32.xlu0 %v255
          %v257 = vpop.xlane.xlu0 %256
          %v258 = vld [vmem:[#allocation3] sm:$0x3f]
          %v259 = vsel %vm254, %v258, 0.0
          %260 = vadd.xlane.f32.xlu0 %v259
          %v261 = vpop.xlane.xlu0 %260
          %v262 = vmul.f32 %v261, 0.00390625
          %s263 = smul.u32 6, 1
          %s264 = sshll.u32 %s263, 4
          %265 = dma.done [#allocation6], %s264
          %s266 = scalar_lea.sflag [#allocation6], 1
          %s267 = smul.u32 2, 1
          %s268 = sshll.u32 %s267, 4
          %269 = dma.done %s266, %s268
          %v270 = vld [vmem:[#allocation4] sm:$0x3f]
          %v272 = vlaneseq
          %v273 = vand.u32 %v272, 127
          %v274 = vlaneseq
          %v275 = vshrl.u32 %v274, 7
          %v276 = vsub.s32 %v273, %v275
          %v277 = vrot.slane %v257, %v276
          %vm278 = vcmask 48128
          %v279 = vsel %vm278, %v277, 0
          %v282 = vsel %vm254, %v270, 0
          %284 = vmatprep.subr.mxu0 0.0
          %285 = vmatpush1.msra.mxu0 %v282
          %286 = vmatprep.subr.mxu0 0.0
          %287 = vmatpush1.msra.mxu0 0.0
          %288 = vmatprep.subr.mxu0 0.0
          %289 = vmatpush1.msra.mxu0 0.0
          %290 = vmatprep.subr.mxu0 0.0
          %291 = vmatpush1.msra.mxu0 0.0
          %292 = vmatprep.subr.mxu0 0.0
          %293 = vmatpush1.msra.mxu0 0.0
          %294 = vmatprep.subr.mxu0 0.0
          %295 = vmatpush1.msra.mxu0 0.0
          %296 = vmatprep.subr.mxu0 0.0
          %297 = vmatpush1.msra.mxu0 0.0
          %298 = vmatprep.subr.mxu0 0.0
          %299 = vmatpush1.msra.mxu0 0.0
          %300 = vmatprep.subr.mxu0 0.0
          %301 = vmatpush1.msra.mxu0 0.0
          %302 = vmatprep.subr.mxu0 0.0
          %303 = vmatpush1.msra.mxu0 0.0
          %304 = vmatprep.subr.mxu0 0.0
          %305 = vmatpush1.msra.mxu0 0.0
          %306 = vmatprep.subr.mxu0 0.0
          %307 = vmatpush1.msra.mxu0 0.0
          %308 = vmatprep.subr.mxu0 0.0
          %309 = vmatpush1.msra.mxu0 0.0
          %310 = vmatprep.subr.mxu0 0.0
          %311 = vmatpush1.msra.mxu0 0.0
          %312 = vmatprep.subr.mxu0 0.0
          %313 = vmatpush1.msra.mxu0 0.0
          %314 = vmatprep.subr.mxu0 0.0
          %315 = vmatpush1.msra.mxu0 0.0
          %316 = vmatprep.subr.mxu0 0.0
          %317 = vmatpush1.msra.mxu0 0.0
          %318 = vmatprep.subr.mxu0 0.0
          %319 = vmatpush1.msra.mxu0 0.0
          %320 = vmatprep.subr.mxu0 0.0
          %321 = vmatpush1.msra.mxu0 0.0
          %322 = vmatprep.subr.mxu0 0.0
          %323 = vmatpush1.msra.mxu0 0.0
          %324 = vmatprep.subr.mxu0 0.0
          %325 = vmatpush1.msra.mxu0 0.0
          %326 = vmatprep.subr.mxu0 0.0
          %327 = vmatpush1.msra.mxu0 0.0
          %328 = vmatprep.subr.mxu0 0.0
          %329 = vmatpush1.msra.mxu0 0.0
          %330 = vmatprep.subr.mxu0 0.0
          %331 = vmatpush1.msra.mxu0 0.0
          %332 = vmatprep.subr.mxu0 0.0
          %333 = vmatpush1.msra.mxu0 0.0
          %334 = vmatprep.subr.mxu0 0.0
          %335 = vmatpush1.msra.mxu0 0.0
          %336 = vmatprep.subr.mxu0 0.0
          %337 = vmatpush1.msra.mxu0 0.0
          %338 = vmatprep.subr.mxu0 0.0
          %339 = vmatpush1.msra.mxu0 0.0
          %340 = vmatprep.subr.mxu0 0.0
          %341 = vmatpush1.msra.mxu0 0.0
          %342 = vmatprep.subr.mxu0 0.0
          %343 = vmatpush1.msra.mxu0 0.0
          %344 = vmatprep.subr.mxu0 0.0
          %345 = vmatpush1.msra.mxu0 0.0
          %346 = vmatprep.subr.mxu0 0.0
          %347 = vmatpush1.msra.mxu0 0.0
          %348 = vmatprep.mubr.f32.mxu0 0.0
          %349 = vmatmul.mubr.f32.gmra.mrb[0].mxu0 %v279
          %v350 = vpop.f32.mrb[0].mxu0
          %v351 = vadd.f32 0.0, %v350
          %v352 = vpop.f32.mrb[0].mxu0
          %353 = vdwg.mxu0
          %v354 = vmax.f32 %v351, 0.0
          %v356 = vlaneseq
          %v357 = vshrl.u32 %v356, 7
          %v358 = vsub.s32 %v273, %v357
          %v359 = vrot.slane %v262, %v358
          %v360 = vsel %vm278, %v359, 0
          %362 = vmatprep.subr.mxu0 0.0
          %363 = vmatpush1.msra.mxu0 %v282
          %364 = vmatprep.subr.mxu0 0.0
          %365 = vmatpush1.msra.mxu0 0.0
          %366 = vmatprep.subr.mxu0 0.0
          %367 = vmatpush1.msra.mxu0 0.0
          %368 = vmatprep.subr.mxu0 0.0
          %369 = vmatpush1.msra.mxu0 0.0
          %370 = vmatprep.subr.mxu0 0.0
          %371 = vmatpush1.msra.mxu0 0.0
          %372 = vmatprep.subr.mxu0 0.0
          %373 = vmatpush1.msra.mxu0 0.0
          %374 = vmatprep.subr.mxu0 0.0
          %375 = vmatpush1.msra.mxu0 0.0
          %376 = vmatprep.subr.mxu0 0.0
          %377 = vmatpush1.msra.mxu0 0.0
          %378 = vmatprep.subr.mxu0 0.0
          %379 = vmatpush1.msra.mxu0 0.0
          %380 = vmatprep.subr.mxu0 0.0
          %381 = vmatpush1.msra.mxu0 0.0
          %382 = vmatprep.subr.mxu0 0.0
          %383 = vmatpush1.msra.mxu0 0.0
          %384 = vmatprep.subr.mxu0 0.0
          %385 = vmatpush1.msra.mxu0 0.0
          %386 = vmatprep.subr.mxu0 0.0
          %387 = vmatpush1.msra.mxu0 0.0
          %388 = vmatprep.subr.mxu0 0.0
          %389 = vmatpush1.msra.mxu0 0.0
          %390 = vmatprep.subr.mxu0 0.0
          %391 = vmatpush1.msra.mxu0 0.0
          %392 = vmatprep.subr.mxu0 0.0
          %393 = vmatpush1.msra.mxu0 0.0
          %394 = vmatprep.subr.mxu0 0.0
          %395 = vmatpush1.msra.mxu0 0.0
          %396 = vmatprep.subr.mxu0 0.0
          %397 = vmatpush1.msra.mxu0 0.0
          %398 = vmatprep.subr.mxu0 0.0
          %399 = vmatpush1.msra.mxu0 0.0
          %400 = vmatprep.subr.mxu0 0.0
          %401 = vmatpush1.msra.mxu0 0.0
          %402 = vmatprep.subr.mxu0 0.0
          %403 = vmatpush1.msra.mxu0 0.0
          %404 = vmatprep.subr.mxu0 0.0
          %405 = vmatpush1.msra.mxu0 0.0
          %406 = vmatprep.subr.mxu0 0.0
          %407 = vmatpush1.msra.mxu0 0.0
          %408 = vmatprep.subr.mxu0 0.0
          %409 = vmatpush1.msra.mxu0 0.0
          %410 = vmatprep.subr.mxu0 0.0
          %411 = vmatpush1.msra.mxu0 0.0
          %412 = vmatprep.subr.mxu0 0.0
          %413 = vmatpush1.msra.mxu0 0.0
          %414 = vmatprep.subr.mxu0 0.0
          %415 = vmatpush1.msra.mxu0 0.0
          %416 = vmatprep.subr.mxu0 0.0
          %417 = vmatpush1.msra.mxu0 0.0
          %418 = vmatprep.subr.mxu0 0.0
          %419 = vmatpush1.msra.mxu0 0.0
          %420 = vmatprep.subr.mxu0 0.0
          %421 = vmatpush1.msra.mxu0 0.0
          %422 = vmatprep.subr.mxu0 0.0
          %423 = vmatpush1.msra.mxu0 0.0
          %424 = vmatprep.subr.mxu0 0.0
          %425 = vmatpush1.msra.mxu0 0.0
          %426 = vmatprep.mubr.f32.mxu0 0.0
          %427 = vmatmul.mubr.f32.gmra.mrb[0].mxu0 %v360
          %v428 = vpop.f32.mrb[0].mxu0
          %v429 = vadd.f32 0.0, %v428
          %v430 = vpop.f32.mrb[0].mxu0
          %431 = vdwg.mxu0
          %v432 = vmax.f32 %v429, 0.0
          %v433 = vadd.f32 %v354, %v432
          %v434 = vld [vmem:[#allocation5] sm:$0x3]
          %vm435 = vcmask 15360
          %v437 = vsel %vm435, %v433, 0
          %vm439 = vcmask 1041408
          %v441 = vsel %vm439, %v434, 0
          %443 = vmatprep.subr.mxu0 0.0
          %444 = vmatpush1.msra.mxu0 %v441
          %445 = vmatprep.subr.mxu0 0.0
          %446 = vmatpush1.msra.mxu0 0.0
          %447 = vmatprep.subr.mxu0 0.0
          %448 = vmatpush1.msra.mxu0 0.0
          %449 = vmatprep.subr.mxu0 0.0
          %450 = vmatpush1.msra.mxu0 0.0
          %451 = vmatprep.subr.mxu0 0.0
          %452 = vmatpush1.msra.mxu0 0.0
          %453 = vmatprep.subr.mxu0 0.0
          %454 = vmatpush1.msra.mxu0 0.0
          %455 = vmatprep.subr.mxu0 0.0
          %456 = vmatpush1.msra.mxu0 0.0
          %457 = vmatprep.subr.mxu0 0.0
          %458 = vmatpush1.msra.mxu0 0.0
          %459 = vmatprep.subr.mxu0 0.0
          %460 = vmatpush1.msra.mxu0 0.0
          %461 = vmatprep.subr.mxu0 0.0
          %462 = vmatpush1.msra.mxu0 0.0
          %463 = vmatprep.subr.mxu0 0.0
          %464 = vmatpush1.msra.mxu0 0.0
          %465 = vmatprep.subr.mxu0 0.0
          %466 = vmatpush1.msra.mxu0 0.0
          %467 = vmatprep.subr.mxu0 0.0
          %468 = vmatpush1.msra.mxu0 0.0
          %469 = vmatprep.subr.mxu0 0.0
          %470 = vmatpush1.msra.mxu0 0.0
          %471 = vmatprep.subr.mxu0 0.0
          %472 = vmatpush1.msra.mxu0 0.0
          %473 = vmatprep.subr.mxu0 0.0
          %474 = vmatpush1.msra.mxu0 0.0
          %475 = vmatprep.subr.mxu0 0.0
          %476 = vmatpush1.msra.mxu0 0.0
          %477 = vmatprep.subr.mxu0 0.0
          %478 = vmatpush1.msra.mxu0 0.0
          %479 = vmatprep.subr.mxu0 0.0
          %480 = vmatpush1.msra.mxu0 0.0
          %481 = vmatprep.subr.mxu0 0.0
          %482 = vmatpush1.msra.mxu0 0.0
          %483 = vmatprep.subr.mxu0 0.0
          %484 = vmatpush1.msra.mxu0 0.0
          %485 = vmatprep.subr.mxu0 0.0
          %486 = vmatpush1.msra.mxu0 0.0
          %487 = vmatprep.subr.mxu0 0.0
          %488 = vmatpush1.msra.mxu0 0.0
          %489 = vmatprep.subr.mxu0 0.0
          %490 = vmatpush1.msra.mxu0 0.0
          %491 = vmatprep.subr.mxu0 0.0
          %492 = vmatpush1.msra.mxu0 0.0
          %493 = vmatprep.subr.mxu0 0.0
          %494 = vmatpush1.msra.mxu0 0.0
          %495 = vmatprep.subr.mxu0 0.0
          %496 = vmatpush1.msra.mxu0 0.0
          %497 = vmatprep.subr.mxu0 0.0
          %498 = vmatpush1.msra.mxu0 0.0
          %499 = vmatprep.subr.mxu0 0.0
          %500 = vmatpush1.msra.mxu0 0.0
          %501 = vmatprep.subr.mxu0 0.0
          %502 = vmatpush1.msra.mxu0 0.0
          %503 = vmatprep.subr.mxu0 0.0
          %504 = vmatpush1.msra.mxu0 0.0
          %505 = vmatprep.subr.mxu0 0.0
          %506 = vmatpush1.msra.mxu0 0.0
          %507 = vmatprep.mubr.f32.mxu0 0.0
          %508 = vmatmul.mubr.f32.gmra.mrb[0].mxu0 %v437
          %v509 = vpop.f32.mrb[0].mxu0
          %v510 = vadd.f32 0.0, %v509
          %v511 = vpop.f32.mrb[0].mxu0
          %512 = vdwg.mxu0
          %v513 = vxor.u32 %v510, 2147483648
          %v514 = vmul.f32 %v513, 1.442695
          %v515 = vpow.pop %v514
          %v516 = vadd.f32 %v515, 1.0
          %v517 = vrcp.pop %v516
          %v518 = vmul.f32 1.0, %v517
          %vm519 = vcmask 40960
          %520 = vst.msk [vmem:[%s133] sm:$0x1] %vm519, %v518
        $region92: #{tpu_custom_call.1} parent=23 // pred_fallthru
          _
        %s521 = sand.u32 %s65, 1
        %s522 = scalar_lea.sflag [#allocation8], %s521
        %s523 = sand.u32 %s65, 1
        %s524 = scalar_lea.vmem [#allocation7], %s523
        // Predicated region
        $region93: #{tpu_custom_call.1} parent=23 // pred_check
          %p525 = pneg %p75
        $region94: #{tpu_custom_call.1} parent=23 // pred_check_branch
          %527 = sbr.rel (%p525) target = $region96
        $region95: #{tpu_custom_call.1} parent=23 // pred_region
          %s529 = ssub.s32 16, 16
          %530 = vsyncadd %s522, %s529
          %s531 = smul.addr %s21, 16
          %s532 = scalar_lea.hbm %s3, %s531
          %s534 = sshll.u32 %s524, 4
          %s535 = int_to_ptr.vmem [resolvable:$true] %s534
          %537 = dma.vmem_to_hbm [thread:$0]  %s535, 16, %s532, %s522
        $region96: #{tpu_custom_call.1} parent=23 // pred_fallthru
          _
      $region24: #{tpu_custom_call.1} parent=5 // pred_fallthru
        _
      %p538 = scmp.le.s32.totalorder 2, %s12
      // Predicated region
      $region97: #{tpu_custom_call.1} parent=5 // pred_check
        %p539 = pneg %p538
      $region98: #{tpu_custom_call.1} parent=5 // pred_check_branch
        %541 = sbr.rel (%p539) target = $region100
      $region99: #{tpu_custom_call.1} parent=5 // pred_region
        %s542 = ssub.s32 %s12, 2
        // Predicated region
        $region101: #{tpu_custom_call.1} parent=99 // pred_check
          %p543 = pneg %p81
        $region102: #{tpu_custom_call.1} parent=99 // pred_check_branch
          %545 = sbr.rel (%p543) target = $region104
        $region103: #{tpu_custom_call.1} parent=99 // pred_region
          %s546 = sand.u32 %s66, 1
          %s547 = scalar_lea.sflag [#allocation8], %s546
          %s548 = sand.u32 %s66, 1
          %s549 = scalar_lea.vmem [#allocation7], %s548
          %550 = dma.done %s547, 16
        $region104: #{tpu_custom_call.1} parent=99 // pred_fallthru
          _
      $region100: #{tpu_custom_call.1} parent=5 // pred_fallthru
        _
    $region6: #{tpu_custom_call.1} parent=1 // loop_footer
      %s16 = sadd.s32 1, %s12
    $region7: #{tpu_custom_call.1} parent=1 // loop_footer_branch
      %11 = sbr.rel target = $region3
    $region8: #{tpu_custom_call.1} parent=1 // loop_exit
      _
    %551 = vsyncpa [#allocation8], 1
    %s552 = scalar_lea.sflag [#allocation8], 1
    %553 = vsyncpa %s552, 1
  %554 = vsyncmov [#allocation6]
  %s555 = vpop.sfrf %554
  %p556 = scmp.eq.s32.totalorder %s555, 0
  %p557 = pneg %p556
  %559 = shalt.err (%p557)
  %s560 = scalar_lea.sflag [#allocation6], 1
  %561 = vsyncmov %s560
  %s562 = vpop.sfrf %561
  %p563 = scmp.eq.s32.totalorder %s562, 0
  %p564 = pneg %p563
  %566 = shalt.err (%p564)

</llo_original>
